<compile_context>
chip_gen: v5e
topology: v5e:2x2
jax: 0.10.0
libtpu: 0.0.40
codegen_flags: <defaults>
</compile_context>

<pallas_src>
import jax
import jax.numpy as jnp
from jax.experimental import pallas as pl
from jax.experimental.pallas import tpu as pltpu

LANE = 128
SUBLANE = 8
# Padded-batch size above which we force >= 2 (even) grid steps so the "parallel" batch axis can
# shard across both TensorCores on multi-TC chips (v7x). No effect on v5e/v6e (1 TC).
_MIN_ROWS_FOR_CORE_SPLIT = 512


def _round_up(x, m):
    return ((x + m - 1) // m) * m


def _cdiv(a, b):
    return -(-a // b)


# ---------------- Fused kernel: whole MLP in one body ----------------

def _make_fused_kernel(num_layers, k0, dp):
    """Returns a kernel computing the full forward for one batch tile.

    Refs:
      x_ref   : (TB, K0)        f32 input tile; K0 = real input features rounded up to 8
      w_ref   : (L, Dp, Dp)     bf16 stacked, zero-padded weights (in, out) per layer
      aff_ref : (2*L, Dp)       f32 rows 2l = scale_l, 2l+1 = shift_l (bias + BN folded)
      o_ref   : (TB, Dp)        padded output tile
    """

    def kernel(x_ref, w_ref, aff_ref, o_ref):
        act = x_ref[...]
        for l in range(num_layers):
            # First layer contracts only over the real (un-padded) input features:
            # static sublane slice of the weight ref (zero-cost view).
            w = w_ref[l, :k0, :] if (l == 0 and k0 < dp) else w_ref[l]
            # bf16 operands on the MXU, f32 accumulation.
            y = jnp.dot(act.astype(jnp.bfloat16), w, preferred_element_type=jnp.float32)
            # Folded Linear-bias + BatchNorm affine (f32), then ReLU for hidden layers.
            y = y * aff_ref[2 * l:2 * l + 1, :] + aff_ref[2 * l + 1:2 * l + 2, :]
            act = jnp.maximum(y, 0.0) if l < num_layers - 1 else y
        o_ref[...] = act.astype(o_ref.dtype)

    return kernel


# ---------------- Wrapper ----------------

def complex_dense_classifier_forward(x, w_stack, affine, output_size, *, max_batch_tile=1024):
    """Single fused pallas_call for the whole classifier forward (eval mode)."""
    B, Din = x.shape
    NL, Dp, _ = w_stack.shape
    K0 = min(_round_up(Din, SUBLANE), Dp)

    # Batch tiling: big tiles for HBM-roofline efficiency, no wasteful last tile, and >= 2 even
    # grid steps for large batches so the batch axis shards across both TCs on v7x.
    B8 = _round_up(B, SUBLANE)
    n_tiles = _cdiv(B8, max_batch_tile)
    if B8 >= _MIN_ROWS_FOR_CORE_SPLIT:
        n_tiles = max(n_tiles, 2)
        if n_tiles % 2:
            n_tiles += 1
    TB = _round_up(_cdiv(B8, n_tiles), SUBLANE)
    grid = _cdiv(B8, TB)
    Bp = grid * TB

    # Pad batch rows to Bp and features only to K0 (NOT to 128 lanes). For an 8-aligned batch with
    # 8-aligned features this is a no-op (no extra HBM pad pass).
    if Bp == B and K0 == Din:
        x_p = x
    else:
        x_p = jnp.zeros((Bp, K0), x.dtype).at[:B, :Din].set(x)

    kernel = _make_fused_kernel(NL, K0, Dp)
    out_p = pl.pallas_call(
        kernel,
        out_shape=jax.ShapeDtypeStruct((Bp, Dp), x.dtype),
        grid=(grid,),
        in_specs=[
            # Activations: one batch tile per grid step, real feature width.
            pl.BlockSpec((TB, K0), lambda i: (i, 0)),
            # Weights / affine params: constant block index -> VMEM-resident, DMA'd once.
            pl.BlockSpec((NL, Dp, Dp), lambda i: (0, 0, 0)),
            pl.BlockSpec((2 * NL, Dp), lambda i: (0, 0)),
        ],
        out_specs=pl.BlockSpec((TB, Dp), lambda i: (i, 0)),
        compiler_params=pltpu.CompilerParams(
            dimension_semantics=("parallel",)),
    )(x_p, w_stack, affine)

    return out_p[:B, :output_size]


# ---------------- Parameter construction (deterministic, PyTorch-shaped) ----------------

def init_params(key, input_size, hidden_sizes, output_size, eps=1e-5):
    """Builds packed (padded) kernel params plus raw per-layer params for the reference."""
    dims = [input_size] + list(hidden_sizes) + [output_size]
    Dp = _round_up(max(dims), LANE)
    NL = len(hidden_sizes) + 1

    w_stack = jnp.zeros((NL, Dp, Dp), jnp.float32)
    affine = jnp.zeros((2 * NL, Dp), jnp.float32)
    raw = []

    prev = input_size
    for l, h in enumerate(hidden_sizes):
        key, kw, kb, kg, kbeta = jax.random.split(key, 5)
        bound = 1.0 / (prev ** 0.5)
        w = jax.random.uniform(kw, (prev, h), jnp.float32, -bound, bound)   # (in, out) = W.T of torch
        b = jax.random.uniform(kb, (h,), jnp.float32, -bound, bound)
        gamma = 1.0 + 0.01 * jax.random.normal(kg, (h,), jnp.float32)
        beta = 0.01 * jax.random.normal(kbeta, (h,), jnp.float32)
        mean = jnp.zeros((h,), jnp.float32)
        var = jnp.ones((h,), jnp.float32)
        raw.append(dict(w=w, b=b, gamma=gamma, beta=beta, mean=mean, var=var))

        # Fold BN (eval mode) and the linear bias into a single affine:
        #   (x@W + b - mean)/sqrt(var+eps)*gamma + beta == x@W * scale + shift
        scale = gamma / jnp.sqrt(var + eps)
        shift = (b - mean) * scale + beta
        w_stack = w_stack.at[l, :prev, :h].set(w)
        affine = affine.at[2 * l, :h].set(scale)
        affine = affine.at[2 * l + 1, :h].set(shift)
        prev = h

    key, kw, kb = jax.random.split(key, 3)
    bound = 1.0 / (prev ** 0.5)
    w_out = jax.random.uniform(kw, (prev, output_size), jnp.float32, -bound, bound)
    b_out = jax.random.uniform(kb, (output_size,), jnp.float32, -bound, bound)
    raw.append(dict(w=w_out, b=b_out))
    w_stack = w_stack.at[NL - 1, :prev, :output_size].set(w_out)
    affine = affine.at[2 * (NL - 1), :output_size].set(1.0)        # output layer: scale = 1
    affine = affine.at[2 * (NL - 1) + 1, :output_size].set(b_out)  # shift = bias

    # Weights in bf16 (native MXU fast path, half the weight DMA / VMEM); affine stays f32.
    return w_stack.astype(jnp.bfloat16), affine, raw


# ---------------- Pure-JAX reference (unfolded BN, unpadded params) ----------------

def reference_forward(x, raw, eps=1e-5, mimic_bf16=False):
    def mm(a, w):
        if mimic_bf16:
            a = a.astype(jnp.bfloat16).astype(jnp.float32)
            w = w.astype(jnp.bfloat16).astype(jnp.float32)
        return a @ w

    out = x
    for p in raw[:-1]:
        out = mm(out, p["w"]) + p["b"]
        out = (out - p["mean"]) / jnp.sqrt(p["var"] + eps) * p["gamma"] + p["beta"]
        out = jnp.maximum(out, 0.0)   # Dropout(0.35) is identity in eval mode
    p = raw[-1]
    return mm(out, p["w"]) + p["b"]


if __name__ == "__main__":
    input_size = 32
    hidden_sizes = [64, 32]
    output_size = 4
    batch = 8

    key = jax.random.PRNGKey(0)
    key, kx = jax.random.split(key)
    x = jax.random.normal(kx, (batch, input_size), jnp.float32)

    w_stack, affine, raw = init_params(key, input_size, hidden_sizes, output_size)

    y = complex_dense_classifier_forward(x, w_stack, affine, output_size)
    y = jax.block_until_ready(y)
    assert y.shape == (batch, output_size)

    # Tight check vs a reference that mimics the kernel's bf16 matmul rounding.
    y_ref_bf16 = reference_forward(x, raw, mimic_bf16=True)
    assert jnp.allclose(y, y_ref_bf16, atol=5e-3, rtol=5e-3)

    # Loose semantic check vs the full-f32 PyTorch-equivalent forward.
    y_ref_f32 = reference_forward(x, raw, mimic_bf16=False)
    assert jnp.allclose(y, y_ref_f32, atol=5e-2, rtol=5e-2)

    print("KERNEL_OK")
</pallas_src>

<mosaic_0001>
module attributes {stable_mosaic.version = 11 : i64} {
  func.func @kernel(%arg0: i32, %arg1: memref<8x32xf32, #tpu.memory_space<vmem>>, %arg2: memref<3x128x128xbf16, #tpu.memory_space<vmem>>, %arg3: memref<6x128xf32, #tpu.memory_space<vmem>>, %arg4: memref<8x128xf32, #tpu.memory_space<vmem>>) attributes {dimension_semantics = [#tpu.dimension_semantics<parallel>], iteration_bounds = array<i64: 1>, scalar_prefetch = 0 : i64, scratch_operands = 0 : i64, tpu.core_type = #tpu.core_type<tc>, window_params = [{transform_indices = @transform_0, window_bounds = array<i64: 8, 32>}, {pipeline_mode = #tpu.pipeline_mode<synchronous>, transform_indices = @transform_1, window_bounds = array<i64: 3, 128, 128>}, {pipeline_mode = #tpu.pipeline_mode<synchronous>, transform_indices = @transform_2, window_bounds = array<i64: 6, 128>}, {transform_indices = @transform_3, window_bounds = array<i64: 8, 128>}]} {
    %c0 = arith.constant 0 : index
    %c0_0 = arith.constant 0 : index
    %0 = vector.load %arg1[%c0, %c0_0] : memref<8x32xf32, #tpu.memory_space<vmem>>, vector<8x32xf32>
    %c0_1 = arith.constant 0 : index
    %c0_2 = arith.constant 0 : index
    %c0_3 = arith.constant 0 : index
    %1 = vector.load %arg2[%c0_1, %c0_2, %c0_3] : memref<3x128x128xbf16, #tpu.memory_space<vmem>>, vector<1x32x128xbf16>
    %2 = vector.shape_cast %1 : vector<1x32x128xbf16> to vector<32x128xbf16>
    %3 = arith.truncf %0 : vector<8x32xf32> to vector<8x32xbf16>
    %cst = arith.constant dense<0.000000e+00> : vector<8x128xf32>
    %4 = tpu.matmul %3, %2, %cst {dimension_numbers = #tpu.dot_dimension_numbers<[1], [0], [0], [1], [0, 0, 1, 1], [], []>} : vector<8x32xbf16>, vector<32x128xbf16>, vector<8x128xf32> -> vector<8x128xf32>
    %c0_4 = arith.constant 0 : index
    %c0_5 = arith.constant 0 : index
    %5 = vector.load %arg3[%c0_4, %c0_5] : memref<6x128xf32, #tpu.memory_space<vmem>>, vector<1x128xf32>
    %6 = vector.broadcast %5 : vector<1x128xf32> to vector<8x128xf32>
    %7 = arith.mulf %4, %6 : vector<8x128xf32>
    %c1 = arith.constant 1 : index
    %c0_6 = arith.constant 0 : index
    %8 = vector.load %arg3[%c1, %c0_6] : memref<6x128xf32, #tpu.memory_space<vmem>>, vector<1x128xf32>
    %9 = vector.broadcast %8 : vector<1x128xf32> to vector<8x128xf32>
    %10 = arith.addf %7, %9 : vector<8x128xf32>
    %cst_7 = arith.constant 0.000000e+00 : f32
    %11 = vector.broadcast %cst_7 : f32 to vector<8x128xf32>
    %12 = arith.maximumf %10, %11 : vector<8x128xf32>
    %c1_8 = arith.constant 1 : index
    %c0_9 = arith.constant 0 : index
    %c0_10 = arith.constant 0 : index
    %13 = vector.load %arg2[%c1_8, %c0_9, %c0_10] : memref<3x128x128xbf16, #tpu.memory_space<vmem>>, vector<1x128x128xbf16>
    %14 = vector.shape_cast %13 : vector<1x128x128xbf16> to vector<128x128xbf16>
    %15 = arith.truncf %12 : vector<8x128xf32> to vector<8x128xbf16>
    %cst_11 = arith.constant dense<0.000000e+00> : vector<8x128xf32>
    %16 = tpu.matmul %15, %14, %cst_11 {dimension_numbers = #tpu.dot_dimension_numbers<[1], [0], [0], [1], [0, 0, 1, 1], [], []>} : vector<8x128xbf16>, vector<128x128xbf16>, vector<8x128xf32> -> vector<8x128xf32>
    %c2 = arith.constant 2 : index
    %c0_12 = arith.constant 0 : index
    %17 = vector.load %arg3[%c2, %c0_12] : memref<6x128xf32, #tpu.memory_space<vmem>>, vector<1x128xf32>
    %18 = vector.broadcast %17 : vector<1x128xf32> to vector<8x128xf32>
    %19 = arith.mulf %16, %18 : vector<8x128xf32>
    %c3 = arith.constant 3 : index
    %c0_13 = arith.constant 0 : index
    %20 = vector.load %arg3[%c3, %c0_13] : memref<6x128xf32, #tpu.memory_space<vmem>>, vector<1x128xf32>
    %21 = vector.broadcast %20 : vector<1x128xf32> to vector<8x128xf32>
    %22 = arith.addf %19, %21 : vector<8x128xf32>
    %cst_14 = arith.constant 0.000000e+00 : f32
    %23 = vector.broadcast %cst_14 : f32 to vector<8x128xf32>
    %24 = arith.maximumf %22, %23 : vector<8x128xf32>
    %c2_15 = arith.constant 2 : index
    %c0_16 = arith.constant 0 : index
    %c0_17 = arith.constant 0 : index
    %25 = vector.load %arg2[%c2_15, %c0_16, %c0_17] : memref<3x128x128xbf16, #tpu.memory_space<vmem>>, vector<1x128x128xbf16>
    %26 = vector.shape_cast %25 : vector<1x128x128xbf16> to vector<128x128xbf16>
    %27 = arith.truncf %24 : vector<8x128xf32> to vector<8x128xbf16>
    %cst_18 = arith.constant dense<0.000000e+00> : vector<8x128xf32>
    %28 = tpu.matmul %27, %26, %cst_18 {dimension_numbers = #tpu.dot_dimension_numbers<[1], [0], [0], [1], [0, 0, 1, 1], [], []>} : vector<8x128xbf16>, vector<128x128xbf16>, vector<8x128xf32> -> vector<8x128xf32>
    %c4 = arith.constant 4 : index
    %c0_19 = arith.constant 0 : index
    %29 = vector.load %arg3[%c4, %c0_19] : memref<6x128xf32, #tpu.memory_space<vmem>>, vector<1x128xf32>
    %30 = vector.broadcast %29 : vector<1x128xf32> to vector<8x128xf32>
    %31 = arith.mulf %28, %30 : vector<8x128xf32>
    %c5 = arith.constant 5 : index
    %c0_20 = arith.constant 0 : index
    %32 = vector.load %arg3[%c5, %c0_20] : memref<6x128xf32, #tpu.memory_space<vmem>>, vector<1x128xf32>
    %33 = vector.broadcast %32 : vector<1x128xf32> to vector<8x128xf32>
    %34 = arith.addf %31, %33 : vector<8x128xf32>
    %c0_21 = arith.constant 0 : index
    %c0_22 = arith.constant 0 : index
    %35 = vector.load %arg4[%c0_21, %c0_22] : memref<8x128xf32, #tpu.memory_space<vmem>>, vector<8x128xf32>
    tpu.vector_store %arg4[%c0_21, %c0_22], %34 {strides = array<i32>} : memref<8x128xf32, #tpu.memory_space<vmem>>, vector<8x128xf32>,
    return
  }
  func.func @transform_0(%arg0: i32) -> (i32, i32) {
    %c0_i32 = arith.constant 0 : i32
    %c0_i32_0 = arith.constant 0 : i32
    return %arg0, %c0_i32 : i32, i32
  }
  func.func @transform_1(%arg0: i32) -> (i32, i32, i32) {
    %c0_i32 = arith.constant 0 : i32
    %c0_i32_0 = arith.constant 0 : i32
    %c0_i32_1 = arith.constant 0 : i32
    %c0_i32_2 = arith.constant 0 : i32
    return %c0_i32, %c0_i32_0, %c0_i32_1 : i32, i32, i32
  }
  func.func @transform_2(%arg0: i32) -> (i32, i32) {
    %c0_i32 = arith.constant 0 : i32
    %c0_i32_0 = arith.constant 0 : i32
    %c0_i32_1 = arith.constant 0 : i32
    return %c0_i32, %c0_i32_0 : i32, i32
  }
  func.func @transform_3(%arg0: i32) -> (i32, i32) {
    %c0_i32 = arith.constant 0 : i32
    %c0_i32_0 = arith.constant 0 : i32
    return %arg0, %c0_i32 : i32, i32
  }
}

</mosaic_0001>

<llo_original>
// kernel: tpu_custom_call.1
$region0: #{tpu_custom_call.1}
  #allocation0 [shape = 'u32[]', space=smem, size = 0x4, offset = 0x4, fixed_abs, tag = 'smem constant byte address 0x4 - core index']
  #allocation1 [shape = 'u32[72,128]{1,0:T(1,128)}', space=vmem, size = 0x9000, scoped, tag = 'internal scratch']
  %s0 = inlined_call_operand.hbm [shape: f32[8,32], index: 0, kind: input, shape index: {}]
  %s1 = inlined_call_operand.hbm [shape: bf16[3,128,128], index: 1, kind: input, shape index: {}]
  %s2 = inlined_call_operand.hbm [shape: f32[6,128], index: 2, kind: input, shape index: {}]
  %s3 = inlined_call_operand.hbm [shape: f32[8,128], index: 3, kind: output, shape index: {}]
  %s4 = sld [smem:[#allocation0]]
  $region34: #{tpu_custom_call.1} parent=0
    _
  %s6 = ssub.s32 1, %s4
  %s7 = scalar_select 0, %s6, %s4
  $region1: #{tpu_custom_call.1} parent=0
    #allocation2 [shape = 'u8[4096]{0}', space=vmem, size = 0x1000, scoped, tag = 'input window, operand 0, single buffered']
    #allocation3 [shape = 's32[1]{0}', space=sflag, size = 0x4, scoped, tag = 'scoped memory for tpu_custom_call.1']
    #allocation4 [shape = 's32[1]{0}', space=sflag, size = 0x4, scoped, tag = 'scoped memory for tpu_custom_call.1']
    #allocation5 [shape = 'u8[98304]{0}', space=vmem, size = 0x18000, scoped, tag = 'input window, operand 1, single buffered']
    #allocation6 [shape = 's32[1]{0}', space=sflag, size = 0x4, scoped, tag = 'scoped memory for tpu_custom_call.1']
    #allocation7 [shape = 'u8[4096]{0}', space=vmem, size = 0x1000, scoped, tag = 'input window, operand 2, single buffered']
    #allocation8 [shape = 'u8[4096]{0}', space=vmem, size = 0x1000, scoped, tag = 'output window, operand 0, single buffered']
    %8 = vsyncpa [#allocation3], 0
    %9 = vsyncpa [#allocation6], 0
    %10 = vsyncpa [#allocation4], 0
    // Predicated region
    $region2: #{tpu_custom_call.1} parent=1 // pred_check
      _
    $region3: #{tpu_custom_call.1} parent=1 // pred_check_branch
      %12 = sbr.rel (0) target = $region5
    $region4: #{tpu_custom_call.1} parent=1 // pred_region
      %14 = vsyncadd [#allocation3], 0
      %s16 = sshll.u32 %s0, 4
      %s17 = int_to_ptr.hbm [resolvable:$true] %s16
      %s18 = sshll.u32 [#allocation2], 4
      %s19 = int_to_ptr.vmem [resolvable:$true] %s18
      %21 = dma.hbm_to_vmem [thread:$0]  %s17, 128, %s19, [#allocation3]
    $region5: #{tpu_custom_call.1} parent=1 // pred_fallthru
      _
    // Predicated region
    $region6: #{tpu_custom_call.1} parent=1 // pred_check
      _
    $region7: #{tpu_custom_call.1} parent=1 // pred_check_branch
      %23 = sbr.rel (0) target = $region9
    $region8: #{tpu_custom_call.1} parent=1 // pred_region
      %25 = vsyncadd [#allocation6], 0
      %s26 = sshll.u32 %s1, 4
      %s27 = int_to_ptr.hbm [resolvable:$true] %s26
      %s28 = sshll.u32 [#allocation5], 4
      %s29 = int_to_ptr.vmem [resolvable:$true] %s28
      %34 = dma.hbm_to_vmem [thread:$0]  %s27, 3072, %s29, [#allocation6], 64, 64, 4
    $region9: #{tpu_custom_call.1} parent=1 // pred_fallthru
      _
    // Predicated region
    $region10: #{tpu_custom_call.1} parent=1 // pred_check
      _
    $region11: #{tpu_custom_call.1} parent=1 // pred_check_branch
      %36 = sbr.rel (0) target = $region13
    $region12: #{tpu_custom_call.1} parent=1 // pred_region
      %38 = vsyncadd [#allocation6], 0
      %s40 = sshll.u32 %s2, 4
      %s41 = int_to_ptr.hbm [resolvable:$true] %s40
      %s42 = sshll.u32 [#allocation7], 4
      %s43 = int_to_ptr.vmem [resolvable:$true] %s42
      %45 = dma.hbm_to_vmem [thread:$0]  %s41, 128, %s43, [#allocation6]
    $region13: #{tpu_custom_call.1} parent=1 // pred_fallthru
      _
    // Predicated region
    $region14: #{tpu_custom_call.1} parent=1 // pred_check
      _
    $region15: #{tpu_custom_call.1} parent=1 // pred_check_branch
      %47 = sbr.rel (0) target = $region17
    $region16: #{tpu_custom_call.1} parent=1 // pred_region
      %49 = dma.done [#allocation3], 128
    $region17: #{tpu_custom_call.1} parent=1 // pred_fallthru
      _
    // Predicated region
    $region18: #{tpu_custom_call.1} parent=1 // pred_check
      _
    $region19: #{tpu_custom_call.1} parent=1 // pred_check_branch
      %51 = sbr.rel (0) target = $region21
    $region20: #{tpu_custom_call.1} parent=1 // pred_region
      %53 = dma.done [#allocation6], 3072
    $region21: #{tpu_custom_call.1} parent=1 // pred_fallthru
      _
    // Predicated region
    $region22: #{tpu_custom_call.1} parent=1 // pred_check
      _
    $region23: #{tpu_custom_call.1} parent=1 // pred_check_branch
      %55 = sbr.rel (0) target = $region25
    $region24: #{tpu_custom_call.1} parent=1 // pred_region
      %57 = dma.done [#allocation6], 128
    $region25: #{tpu_custom_call.1} parent=1 // pred_fallthru
      _
    %v59 = vld [vmem:[#allocation2] sm:$0xff]
    %v60 = vld [vmem:[#allocation5] sm:$0xf]
    %v61 = vld [vmem:[#allocation5 + $0x4] sm:$0xf]
    %v62 = vld [vmem:[#allocation5 + $0x8] sm:$0xf]
    %v63 = vld [vmem:[#allocation5 + $0xc] sm:$0xf]
    %v64 = vpack.c.bf16 %v59, %v59
    %v69 = vunpack.c.l.b16 %v60
    %v70 = vunpack.c.l.b16 %v61
    %v71 = vunpack.c.l.b16 %v62
    %v72 = vunpack.c.l.b16 %v63
    %v73 = vpack.c.b16 %v70, %v69
    %v74 = vpack.c.b16 %v72, %v71
    %vm77 = vcmask 261120
    %v79 = vsel %vm77, %v64, 0
    %81 = vmatpush.bf16.msra.mxu0 0
    %82 = vmatpush.bf16.msra.mxu0 0
    %83 = vmatpush.bf16.msra.mxu0 0
    %84 = vmatpush.bf16.msra.mxu0 0
    %85 = vmatpush.bf16.msra.mxu0 0
    %86 = vmatpush.bf16.msra.mxu0 0
    %87 = vmatpush.bf16.msra.mxu0 %v74
    %88 = vmatpush.bf16.msra.mxu0 %v73
    %89 = vmatmul.bf16.gmra.mxu0 %v79
    %v90 = vpop.f32.mrf.mxu0
    %v91 = vadd.f32 0.0, %v90
    %v92 = vpop.f32.mrf.mxu0
    %93 = vdwg.mxu0
    %v94 = vld [vmem:[#allocation7] sm:$0x1]
    %v95 = vperm.slane %v94, 0
    %v96 = vmul.f32 %v91, %v95
    %v97 = vld [vmem:[#allocation7 + $0x1] sm:$0x1]
    %v98 = vperm.slane %v97, 0
    %v99 = vadd.f32 %v96, %v98
    %v100 = vmax.f32 %v99, 0.0
    %s101 = scalar_lea.vmem [#allocation5], 64
    %v102 = vld [vmem:[%s101] sm:$0xf]
    %v103 = vld [vmem:[%s101 + $0x4] sm:$0xf]
    %v104 = vld [vmem:[%s101 + $0x8] sm:$0xf]
    %v105 = vld [vmem:[%s101 + $0xc] sm:$0xf]
    %v106 = vld [vmem:[%s101 + $0x10] sm:$0xf]
    %v107 = vld [vmem:[%s101 + $0x14] sm:$0xf]
    %v108 = vld [vmem:[%s101 + $0x18] sm:$0xf]
    %v109 = vld [vmem:[%s101 + $0x1c] sm:$0xf]
    %v110 = vld [vmem:[%s101 + $0x20] sm:$0xf]
    %v111 = vld [vmem:[%s101 + $0x24] sm:$0xf]
    %v112 = vld [vmem:[%s101 + $0x28] sm:$0xf]
    %v113 = vld [vmem:[%s101 + $0x2c] sm:$0xf]
    %v114 = vld [vmem:[%s101 + $0x30] sm:$0xf]
    %v115 = vld [vmem:[%s101 + $0x34] sm:$0xf]
    %v116 = vld [vmem:[%s101 + $0x38] sm:$0xf]
    %v117 = vld [vmem:[%s101 + $0x3c] sm:$0xf]
    %v118 = vpack.c.bf16 %v100, %v100
    %v135 = vunpack.c.l.b16 %v102
    %v136 = vunpack.c.l.b16 %v103
    %v137 = vunpack.c.l.b16 %v104
    %v138 = vunpack.c.l.b16 %v105
    %v139 = vunpack.c.l.b16 %v106
    %v140 = vunpack.c.l.b16 %v107
    %v141 = vunpack.c.l.b16 %v108
    %v142 = vunpack.c.l.b16 %v109
    %v143 = vunpack.c.l.b16 %v110
    %v144 = vunpack.c.l.b16 %v111
    %v145 = vunpack.c.l.b16 %v112
    %v146 = vunpack.c.l.b16 %v113
    %v147 = vunpack.c.l.b16 %v114
    %v148 = vunpack.c.l.b16 %v115
    %v149 = vunpack.c.l.b16 %v116
    %v150 = vunpack.c.l.b16 %v117
    %v151 = vpack.c.b16 %v136, %v135
    %v152 = vpack.c.b16 %v138, %v137
    %v153 = vpack.c.b16 %v140, %v139
    %v154 = vpack.c.b16 %v142, %v141
    %v155 = vpack.c.b16 %v144, %v143
    %v156 = vpack.c.b16 %v146, %v145
    %v157 = vpack.c.b16 %v148, %v147
    %v158 = vpack.c.b16 %v150, %v149
    %167 = vmatpush.bf16.msra.mxu0 %v158
    %168 = vmatpush.bf16.msra.mxu0 %v157
    %169 = vmatpush.bf16.msra.mxu0 %v156
    %170 = vmatpush.bf16.msra.mxu0 %v155
    %171 = vmatpush.bf16.msra.mxu0 %v154
    %172 = vmatpush.bf16.msra.mxu0 %v153
    %173 = vmatpush.bf16.msra.mxu0 %v152
    %174 = vmatpush.bf16.msra.mxu0 %v151
    %175 = vmatmul.bf16.gmra.mxu0 %v118
    %v176 = vpop.f32.mrf.mxu0
    %v177 = vadd.f32 0.0, %v176
    %v178 = vpop.f32.mrf.mxu0
    %179 = vdwg.mxu0
    %v180 = vld [vmem:[#allocation7 + $0x2] sm:$0x1]
    %v181 = vperm.slane %v180, 0
    %v182 = vmul.f32 %v177, %v181
    %v183 = vld [vmem:[#allocation7 + $0x3] sm:$0x1]
    %v184 = vperm.slane %v183, 0
    %v185 = vadd.f32 %v182, %v184
    %v186 = vmax.f32 %v185, 0.0
    %s187 = scalar_lea.vmem [#allocation5], 128
    %v188 = vld [vmem:[%s187] sm:$0xf]
    %v189 = vld [vmem:[%s187 + $0x4] sm:$0xf]
    %v190 = vld [vmem:[%s187 + $0x8] sm:$0xf]
    %v191 = vld [vmem:[%s187 + $0xc] sm:$0xf]
    %v192 = vld [vmem:[%s187 + $0x10] sm:$0xf]
    %v193 = vld [vmem:[%s187 + $0x14] sm:$0xf]
    %v194 = vld [vmem:[%s187 + $0x18] sm:$0xf]
    %v195 = vld [vmem:[%s187 + $0x1c] sm:$0xf]
    %v196 = vld [vmem:[%s187 + $0x20] sm:$0xf]
    %v197 = vld [vmem:[%s187 + $0x24] sm:$0xf]
    %v198 = vld [vmem:[%s187 + $0x28] sm:$0xf]
    %v199 = vld [vmem:[%s187 + $0x2c] sm:$0xf]
    %v200 = vld [vmem:[%s187 + $0x30] sm:$0xf]
    %v201 = vld [vmem:[%s187 + $0x34] sm:$0xf]
    %v202 = vld [vmem:[%s187 + $0x38] sm:$0xf]
    %v203 = vld [vmem:[%s187 + $0x3c] sm:$0xf]
    %v204 = vpack.c.bf16 %v186, %v186
    %v221 = vunpack.c.l.b16 %v188
    %v222 = vunpack.c.l.b16 %v189
    %v223 = vunpack.c.l.b16 %v190
    %v224 = vunpack.c.l.b16 %v191
    %v225 = vunpack.c.l.b16 %v192
    %v226 = vunpack.c.l.b16 %v193
    %v227 = vunpack.c.l.b16 %v194
    %v228 = vunpack.c.l.b16 %v195
    %v229 = vunpack.c.l.b16 %v196
    %v230 = vunpack.c.l.b16 %v197
    %v231 = vunpack.c.l.b16 %v198
    %v232 = vunpack.c.l.b16 %v199
    %v233 = vunpack.c.l.b16 %v200
    %v234 = vunpack.c.l.b16 %v201
    %v235 = vunpack.c.l.b16 %v202
    %v236 = vunpack.c.l.b16 %v203
    %v237 = vpack.c.b16 %v222, %v221
    %v238 = vpack.c.b16 %v224, %v223
    %v239 = vpack.c.b16 %v226, %v225
    %v240 = vpack.c.b16 %v228, %v227
    %v241 = vpack.c.b16 %v230, %v229
    %v242 = vpack.c.b16 %v232, %v231
    %v243 = vpack.c.b16 %v234, %v233
    %v244 = vpack.c.b16 %v236, %v235
    %253 = vmatpush.bf16.msra.mxu0 %v244
    %254 = vmatpush.bf16.msra.mxu0 %v243
    %255 = vmatpush.bf16.msra.mxu0 %v242
    %256 = vmatpush.bf16.msra.mxu0 %v241
    %257 = vmatpush.bf16.msra.mxu0 %v240
    %258 = vmatpush.bf16.msra.mxu0 %v239
    %259 = vmatpush.bf16.msra.mxu0 %v238
    %260 = vmatpush.bf16.msra.mxu0 %v237
    %261 = vmatmul.bf16.gmra.mxu0 %v204
    %v262 = vpop.f32.mrf.mxu0
    %v263 = vadd.f32 0.0, %v262
    %v264 = vpop.f32.mrf.mxu0
    %265 = vdwg.mxu0
    %v266 = vld [vmem:[#allocation7 + $0x4] sm:$0x1]
    %v267 = vperm.slane %v266, 0
    %v268 = vmul.f32 %v263, %v267
    %v269 = vld [vmem:[#allocation7 + $0x5] sm:$0x1]
    %v270 = vperm.slane %v269, 0
    %v271 = vadd.f32 %v268, %v270
    %272 = vst [vmem:[#allocation8] sm:$0xff] %v271
    // Predicated region
    $region26: #{tpu_custom_call.1} parent=1 // pred_check
      _
    $region27: #{tpu_custom_call.1} parent=1 // pred_check_branch
      %274 = sbr.rel (0) target = $region29
    $region28: #{tpu_custom_call.1} parent=1 // pred_region
      %276 = vsyncadd [#allocation4], 0
      %s278 = sshll.u32 [#allocation8], 4
      %s279 = int_to_ptr.vmem [resolvable:$true] %s278
      %s280 = sshll.u32 %s3, 4
      %s281 = int_to_ptr.hbm [resolvable:$true] %s280
      %283 = dma.vmem_to_hbm [thread:$0]  %s279, 128, %s281, [#allocation4]
    $region29: #{tpu_custom_call.1} parent=1 // pred_fallthru
      _
    // Predicated region
    $region30: #{tpu_custom_call.1} parent=1 // pred_check
      _
    $region31: #{tpu_custom_call.1} parent=1 // pred_check_branch
      %285 = sbr.rel (0) target = $region33
    $region32: #{tpu_custom_call.1} parent=1 // pred_region
      %287 = dma.done [#allocation4], 128
    $region33: #{tpu_custom_call.1} parent=1 // pred_fallthru
      _
    %288 = vsyncpa [#allocation3], 1
    %289 = vsyncpa [#allocation6], 1
    %290 = vsyncpa [#allocation4], 1

</llo_original>
